<compile_context>
chip_gen: v5e
topology: v5e:2x2
jax: 0.10.0
libtpu: 0.0.40
codegen_flags: <defaults>
</compile_context>

<pallas_src>
import jax
import jax.numpy as jnp
from jax.experimental import pallas as pl
from jax.experimental.pallas import tpu as pltpu


def _round_up(n, m):
    return ((n + m - 1) // m) * m


def lifetable_kernel(x_ref, w_ref, b_ref, o_ref):
    # x_ref: (2, TB) VMEM, batch in lanes; w_ref: (2,) SMEM f32; b_ref: (1,) SMEM f32
    # o_ref: (1, TB) VMEM, lane-dense output row.
    x = x_ref[...].astype(jnp.float32)                     # full-vreg load
    y = x[0:1, :] * w_ref[0] + x[1:2, :] * w_ref[1] + b_ref[0]   # 2-term VPU FMA
    o_ref[...] = y.astype(o_ref.dtype)


def lifetable_forward(x, weight, bias, *, tb=None, force_pallas=False):
    """x: (B, F) with F >= 5, weight: (1, 2), bias: (1,) -> (B, 1)."""
    B, F = x.shape
    assert F >= 5, f"LifeTable slices x[:, 3:5]; need F >= 5, got F={F}"

    # Small-B fast path: pallas_call launch + pipeline prologue (microseconds)
    # dwarfs the nanoseconds of real work; XLA fuses slice+dot trivially.
    if not force_pallas and B < 4096:
        return (x[:, 3:5] @ weight.reshape(1, 2).T.astype(x.dtype)
                + bias.reshape(1, 1).astype(x.dtype))

    # Present the kernel with only the data it uses, batch mapped to lanes.
    xs = x[:, 3:5].T                                        # (2, B), lane-dense

    # SMEM is 32-bit scalar memory: keep params in f32, cast result at the end.
    w_flat = weight.reshape(-1).astype(jnp.float32)         # (2,)
    b_flat = bias.reshape(-1).astype(jnp.float32)           # (1,)

    # Batch (lane) tile: full array for modest B; otherwise a multiple of 128
    # giving >= 2 grid steps (v7x megacore) and capped so double-buffered
    # input+output tiles stay ~MiB-scale (VMEM is nowhere near a constraint).
    if tb is None:
        if B <= 1024:
            tb = B
        else:
            tb = min(_round_up(pl.cdiv(B, 2), 128), 512 * 1024)
    nb = pl.cdiv(B, tb)

    itemsize = jnp.dtype(x.dtype).itemsize
    cost = pl.CostEstimate(
        flops=4 * B,                                        # 2 mul + 2 add per row
        transcendentals=0,
        bytes_accessed=2 * B * itemsize + B * itemsize + 3 * 4,
    )

    out = pl.pallas_call(
        lifetable_kernel,
        out_shape=jax.ShapeDtypeStruct((1, B), x.dtype),
        grid_spec=pltpu.PrefetchScalarGridSpec(
            num_scalar_prefetch=0,
            grid=(nb,),
            in_specs=[
                pl.BlockSpec((2, tb), lambda i: (0, i)),
                pl.BlockSpec(memory_space=pltpu.MemorySpace.SMEM),  # weight (2,)
                pl.BlockSpec(memory_space=pltpu.MemorySpace.SMEM),  # bias   (1,)
            ],
            out_specs=pl.BlockSpec((1, tb), lambda i: (0, i)),
        ),
        compiler_params=pltpu.CompilerParams(
            dimension_semantics=("parallel",),
        ),
        cost_estimate=cost,
    )(xs, w_flat, b_flat)

    return out.reshape(B, 1)


def lifetable_reference(x, weight, bias):
    return x[:, 3:5] @ weight.T + bias.reshape(1, 1)


if __name__ == "__main__":
    key = jax.random.PRNGKey(0)
    kx, kw, kb = jax.random.split(key, 3)

    # Deterministic parameter init (mimics torch Linear's uniform(-1/sqrt(2), 1/sqrt(2)))
    bound = 1.0 / jnp.sqrt(2.0)
    weight = jax.random.uniform(kw, (1, 2), dtype=jnp.float32, minval=-bound, maxval=bound)
    bias = jax.random.uniform(kb, (1,), dtype=jnp.float32, minval=-bound, maxval=bound)

    # --- small-shape test (single grid step; forces the Pallas path) ---
    B, F = 8, 8
    x = jax.random.normal(kx, (B, F), dtype=jnp.float32)
    out = lifetable_forward(x, weight, bias, force_pallas=True)
    out = jax.block_until_ready(out)
    ref = lifetable_reference(x, weight, bias)
    assert out.shape == (B, 1), out.shape
    assert jnp.allclose(out, ref, atol=1e-5, rtol=1e-5), (out, ref)

    # --- multi-step grid with a partial last lane tile (tb=256, nb=4) ---
    B2 = 1000
    x2 = jax.random.normal(kx, (B2, F), dtype=jnp.float32)
    out2 = lifetable_forward(x2, weight, bias, tb=256, force_pallas=True)
    out2 = jax.block_until_ready(out2)
    ref2 = lifetable_reference(x2, weight, bias)
    assert out2.shape == (B2, 1), out2.shape
    assert jnp.allclose(out2, ref2, atol=1e-5, rtol=1e-5)

    print("KERNEL_OK")
</pallas_src>

<mosaic_0001>
module attributes {stable_mosaic.version = 11 : i64} {
  func.func @lifetable_kernel(%arg0: i32, %arg1: memref<2x8xf32, #tpu.memory_space<vmem>>, %arg2: memref<2xf32, #tpu.memory_space<smem>>, %arg3: memref<1xf32, #tpu.memory_space<smem>>, %arg4: memref<1x8xf32, #tpu.memory_space<vmem>>) attributes {dimension_semantics = [#tpu.dimension_semantics<parallel>], iteration_bounds = array<i64: 1>, scalar_prefetch = 0 : i64, scratch_operands = 0 : i64, tpu.core_type = #tpu.core_type<tc>, window_params = [{transform_indices = @transform_0, window_bounds = array<i64: 2, 8>}, {transform_indices = @transform_1, window_bounds = array<i64: 2>}, {transform_indices = @transform_2, window_bounds = array<i64: 1>}, {transform_indices = @transform_3, window_bounds = array<i64: 1, 8>}]} {
    %c0 = arith.constant 0 : index
    %c0_0 = arith.constant 0 : index
    %0 = vector.load %arg1[%c0, %c0_0] : memref<2x8xf32, #tpu.memory_space<vmem>>, vector<2x8xf32>
    %1 = vector.extract_strided_slice %0 {offsets = [0, 0], sizes = [1, 8], strides = [1, 1]} : vector<2x8xf32> to vector<1x8xf32>
    %c0_1 = arith.constant 0 : index
    %2 = memref.load %arg2[%c0_1] : memref<2xf32, #tpu.memory_space<smem>>
    %3 = vector.broadcast %2 : f32 to vector<1x8xf32>
    %4 = arith.mulf %1, %3 : vector<1x8xf32>
    %5 = vector.extract_strided_slice %0 {offsets = [1, 0], sizes = [1, 8], strides = [1, 1]} : vector<2x8xf32> to vector<1x8xf32>
    %c1 = arith.constant 1 : index
    %6 = memref.load %arg2[%c1] : memref<2xf32, #tpu.memory_space<smem>>
    %7 = vector.broadcast %6 : f32 to vector<1x8xf32>
    %8 = arith.mulf %5, %7 : vector<1x8xf32>
    %9 = arith.addf %4, %8 : vector<1x8xf32>
    %c0_2 = arith.constant 0 : index
    %10 = memref.load %arg3[%c0_2] : memref<1xf32, #tpu.memory_space<smem>>
    %11 = vector.broadcast %10 : f32 to vector<1x8xf32>
    %12 = arith.addf %9, %11 : vector<1x8xf32>
    %c0_3 = arith.constant 0 : index
    %c0_4 = arith.constant 0 : index
    %13 = vector.load %arg4[%c0_3, %c0_4] : memref<1x8xf32, #tpu.memory_space<vmem>>, vector<1x8xf32>
    tpu.vector_store %arg4[%c0_3, %c0_4], %12 {strides = array<i32>} : memref<1x8xf32, #tpu.memory_space<vmem>>, vector<1x8xf32>,
    return
  }
  func.func @transform_0(%arg0: i32) -> (i32, i32) {
    %c0_i32 = arith.constant 0 : i32
    %c0_i32_0 = arith.constant 0 : i32
    return %c0_i32, %arg0 : i32, i32
  }
  func.func @transform_1(%arg0: i32) -> i32 {
    %c0_i32 = arith.constant 0 : i32
    %c0_i32_0 = arith.constant 0 : i32
    return %c0_i32 : i32
  }
  func.func @transform_2(%arg0: i32) -> i32 {
    %c0_i32 = arith.constant 0 : i32
    %c0_i32_0 = arith.constant 0 : i32
    return %c0_i32 : i32
  }
  func.func @transform_3(%arg0: i32) -> (i32, i32) {
    %c0_i32 = arith.constant 0 : i32
    %c0_i32_0 = arith.constant 0 : i32
    return %c0_i32, %arg0 : i32, i32
  }
}

</mosaic_0001>

<llo_original>
// kernel: tpu_custom_call.1
$region0: #{tpu_custom_call.1}
  #allocation0 [shape = 'u32[]', space=smem, size = 0x4, offset = 0x4, fixed_abs, tag = 'smem constant byte address 0x4 - core index']
  #allocation1 [shape = 'u32[72,128]{1,0:T(1,128)}', space=vmem, size = 0x9000, scoped, tag = 'internal scratch']
  #allocation2 [shape = 'f32[1]{0:T(128)S(6)}', space=smem, size = 0x200, scoped, tag = 'scoped memory for tpu_custom_call.1']
  %s0 = inlined_call_operand.vmem [shape: f32[2,8], index: 0, kind: input, shape index: {}]
  %s1 = inlined_call_operand.hbm [shape: f32[2], index: 1, kind: input, shape index: {}]
  %s2 = inlined_call_operand.<no memory space> [shape: f32[1], index: 2, kind: input, shape index: {}]
  %s3 = inlined_call_operand.hbm [shape: f32[1,8], index: 3, kind: output, shape index: {}]
  %s4 = sld [smem:[#allocation0]]
  $region26: #{tpu_custom_call.1} parent=0
    _
  %s6 = ssub.s32 1, %s4
  %s7 = scalar_select 0, %s6, %s4
  %8 = sst [smem:[#allocation2]] %s2
  $region1: #{tpu_custom_call.1} parent=0
    #allocation3 [shape = 'u8[512]{0}', space=smem, size = 0x200, scoped, tag = 'input window, operand 1, single buffered']
    #allocation4 [shape = 's32[1]{0}', space=sflag, size = 0x4, scoped, tag = 'scoped memory for tpu_custom_call.1']
    #allocation5 [shape = 's32[1]{0}', space=sflag, size = 0x4, scoped, tag = 'scoped memory for tpu_custom_call.1']
    #allocation6 [shape = 'u8[512]{0}', space=vmem, size = 0x400, scoped, tag = 'output window, operand 0, single buffered']
    %9 = vsyncpa [#allocation5], 0
    %10 = vsyncpa [#allocation4], 0
    // Predicated region
    $region2: #{tpu_custom_call.1} parent=1 // pred_check
      _
    $region3: #{tpu_custom_call.1} parent=1 // pred_check_branch
      %12 = sbr.rel (0) target = $region5
    $region4: #{tpu_custom_call.1} parent=1 // pred_region
      _
    $region5: #{tpu_custom_call.1} parent=1 // pred_fallthru
      _
    // Predicated region
    $region6: #{tpu_custom_call.1} parent=1 // pred_check
      _
    $region7: #{tpu_custom_call.1} parent=1 // pred_check_branch
      %14 = sbr.rel (0) target = $region9
    $region8: #{tpu_custom_call.1} parent=1 // pred_region
      %16 = vsyncadd [#allocation5], 0
      %s18 = sshll.u32 %s1, 4
      %s19 = int_to_ptr.hbm [resolvable:$true] %s18
      %21 = dma.hbm_to_smem %s19, 16, [#allocation3], [#allocation5]
    $region9: #{tpu_custom_call.1} parent=1 // pred_fallthru
      _
    // Predicated region
    $region10: #{tpu_custom_call.1} parent=1 // pred_check
      _
    $region11: #{tpu_custom_call.1} parent=1 // pred_check_branch
      %23 = sbr.rel (0) target = $region13
    $region12: #{tpu_custom_call.1} parent=1 // pred_region
      _
    $region13: #{tpu_custom_call.1} parent=1 // pred_fallthru
      _
    // Predicated region
    $region14: #{tpu_custom_call.1} parent=1 // pred_check
      _
    $region15: #{tpu_custom_call.1} parent=1 // pred_check_branch
      %25 = sbr.rel (0) target = $region17
    $region16: #{tpu_custom_call.1} parent=1 // pred_region
      %27 = dma.done [#allocation5], 16
    $region17: #{tpu_custom_call.1} parent=1 // pred_fallthru
      _
    %28 = sfence
    %v29 = vld [vmem:[%s0] sm:$0x3]
    %s30 = sld [smem:[#allocation3]]
    %v31 = vstv %s30
    %v32 = vmul.f32 %v29, %v31
    %s33 = sld [smem:[#allocation3 + $0x1]]
    %v34 = vstv %s33
    %v35 = vmul.f32 %v29, %v34
    %v37 = vrot.slane %v35, 1
    %v39 = vadd.f32 %v32, %v37
    %s40 = sld [smem:[#allocation2]]
    %v41 = vstv %s40
    %v42 = vadd.f32 %v39, %v41
    %vm43 = vcmask 57344
    %44 = vst.msk [vmem:[#allocation6] sm:$0x1] %vm43, %v42
    // Predicated region
    $region18: #{tpu_custom_call.1} parent=1 // pred_check
      _
    $region19: #{tpu_custom_call.1} parent=1 // pred_check_branch
      %46 = sbr.rel (0) target = $region21
    $region20: #{tpu_custom_call.1} parent=1 // pred_region
      %48 = vsyncadd [#allocation4], 0
      %s50 = sshll.u32 [#allocation6], 4
      %s51 = int_to_ptr.vmem [resolvable:$true] %s50
      %s52 = sshll.u32 %s3, 4
      %s53 = int_to_ptr.hbm [resolvable:$true] %s52
      %55 = dma.vmem_to_hbm [thread:$0]  %s51, 16, %s53, [#allocation4]
    $region21: #{tpu_custom_call.1} parent=1 // pred_fallthru
      _
    // Predicated region
    $region22: #{tpu_custom_call.1} parent=1 // pred_check
      _
    $region23: #{tpu_custom_call.1} parent=1 // pred_check_branch
      %57 = sbr.rel (0) target = $region25
    $region24: #{tpu_custom_call.1} parent=1 // pred_region
      %59 = dma.done [#allocation4], 16
    $region25: #{tpu_custom_call.1} parent=1 // pred_fallthru
      _
    %60 = vsyncpa [#allocation4], 1
    %61 = vsyncpa [#allocation5], 1

</llo_original>
